<compile_context>
chip_gen: v7x
topology: tpu7x:2x2x1
jax: 0.10.0
libtpu: 0.0.40
codegen_flags: <defaults>
</compile_context>

<pallas_src>
import functools
import math

import jax
import jax.numpy as jnp
from jax.experimental import pallas as pl
from jax.experimental.pallas import tpu as pltpu


def _round_up(n: int, m: int) -> int:
    return ((n + m - 1) // m) * m


# ----------------------------------------------------------------------------
# Kernel
# ----------------------------------------------------------------------------
def _linear_kernel(x_ref, w_ref, b_ref, o_ref):
    # x_ref: (TM, D), w_ref: (D, TN), b_ref: (1, TN), o_ref: (TM, TN)
    # Canonical MXU contraction, f32 accumulation; bias add in f32; cast only
    # at the final store (v5e-safe for bf16 inputs).
    acc = jnp.dot(x_ref[...], w_ref[...], preferred_element_type=jnp.float32)
    o_ref[...] = (acc + b_ref[...].astype(jnp.float32)).astype(o_ref.dtype)


# ----------------------------------------------------------------------------
# One-time ("init") parameter re-layout -- NOT in the per-call path.
# ----------------------------------------------------------------------------
def prepare_params(weight, bias):
    """Pad classes to a lane multiple (128) and store the weight as (D, Cp).

    weight: (n_classes, in_dim)  -- PyTorch nn.Linear layout
    bias:   (n_classes,)
    Returns (w_t, b) with w_t: (in_dim, Cp), b: (1, Cp).
    """
    C, _D = weight.shape
    Cp = _round_up(C, 128)
    w_t = jnp.pad(jnp.asarray(weight).T, ((0, 0), (0, Cp - C)))   # (D, Cp)
    b2 = jnp.pad(jnp.asarray(bias), (0, Cp - C)).reshape(1, Cp)   # (1, Cp)
    return w_t, b2


# ----------------------------------------------------------------------------
# pallas_call wrapper (all shapes/tiles static)
# ----------------------------------------------------------------------------
@functools.partial(
    jax.jit,
    static_argnames=("n_classes", "tm", "tn", "vmem_limit", "single_buffer_resident"),
)
def _linear_call(x, w_t, b, *, n_classes, tm, tn, vmem_limit, single_buffer_resident):
    B, D = x.shape
    Cp = w_t.shape[1]
    n_class_tiles = Cp // tn            # tn always divides Cp
    n_batch_tiles = pl.cdiv(B, tm)      # ragged last block is clipped by Pallas

    # Weight/bias tiles depend only on the (outer) class axis; with a single
    # class tile they are grid-invariant and double-buffering only wastes VMEM.
    resident_kw = {}
    if single_buffer_resident and n_class_tiles == 1:
        resident_kw = dict(pipeline_mode=pl.Buffered(1))

    out = pl.pallas_call(
        _linear_kernel,
        out_shape=jax.ShapeDtypeStruct((B, Cp), x.dtype),
        grid_spec=pl.GridSpec(
            # Class axis OUTER, batch axis INNER: each weight tile is DMA'd
            # from HBM exactly once.
            grid=(n_class_tiles, n_batch_tiles),
            in_specs=[
                pl.BlockSpec((tm, D), lambda j, i: (i, 0)),                 # x
                pl.BlockSpec((D, tn), lambda j, i: (0, j), **resident_kw),  # weight
                pl.BlockSpec((1, tn), lambda j, i: (0, j), **resident_kw),  # bias
            ],
            out_specs=pl.BlockSpec((tm, tn), lambda j, i: (i, j)),
        ),
        compiler_params=pltpu.CompilerParams(
            dimension_semantics=("parallel", "parallel"),
            vmem_limit_bytes=vmem_limit,
        ),
    )(x, w_t, b)
    # Strip the lane padding of the class dim (batch is never padded).
    return out[:, :n_classes]


_SINGLE_BUFFER_OK = True  # flipped to False if pl.Buffered(1) is rejected


def linear_classifier(x, w_t, b, n_classes, *, tile_m=256, tile_n=256):
    """y = x @ weight.T + bias with params pre-laid-out by prepare_params().

    x:   (..., in_dim)
    w_t: (in_dim, Cp)
    b:   (1, Cp)
    """
    global _SINGLE_BUFFER_OK
    *lead, D = x.shape
    assert w_t.shape[0] == D
    Cp = w_t.shape[1]
    x2 = x.reshape(-1, D)
    B = x2.shape[0]

    x_bytes = jnp.dtype(x.dtype).itemsize
    w_bytes = jnp.dtype(w_t.dtype).itemsize
    # Sub-32-bit dtypes pack along sublanes: keep TM a multiple of the packing.
    sublane = {4: 8, 2: 16, 1: 32}.get(x_bytes, 8)

    TM = max(sublane, min(_round_up(tile_m, sublane), _round_up(B, sublane)))
    # Lane-dense class tile (multiple of 128) that divides Cp.
    TN = math.gcd(min(_round_up(tile_n, 128), Cp), Cp)

    # v7x has 2 TensorCores: make sure the "parallel" grid has >= 2 steps when
    # the batch is big enough to split (near-free on v5e/v6e).
    if (Cp // TN) * pl.cdiv(B, TM) < 2 and B >= 2 * sublane:
        TM = _round_up(pl.cdiv(B, 2), sublane)

    def vmem_est(tm, tn):
        return (2 * tm * D * x_bytes        # x tiles (double-buffered)
                + 2 * D * tn * w_bytes      # weight tile(s)
                + 2 * tn * w_bytes          # bias tile(s)
                + 2 * tm * tn * x_bytes     # output tiles (double-buffered)
                + tm * tn * 4)              # f32 accumulator

    # Conservative budget so the same tiling also fits v7x's 64 MiB VMEM.
    budget = 48 * 1024 * 1024
    while vmem_est(TM, TN) > budget and TM > sublane:
        TM = max(sublane, (TM // 2) // sublane * sublane)
    if vmem_est(TM, TN) > budget and TN > 128:
        TN = 128
    # TODO(synk): if in_dim is so large that even (sublane, D) + (D, 128) tiles
    # exceed the budget, add a K grid axis (reduction last, "arbitrary") with an
    # f32 VMEM accumulator and pl.when(k==0)/pl.when(k==last) init/finalize.

    vmem_limit = max(16 * 1024 * 1024,
                     min(int(vmem_est(TM, TN) * 1.5) + 2 * 1024 * 1024,
                         64 * 1024 * 1024))

    kwargs = dict(n_classes=n_classes, tm=TM, tn=TN, vmem_limit=vmem_limit)
    if _SINGLE_BUFFER_OK:
        try:
            out = _linear_call(x2, w_t, b, single_buffer_resident=True, **kwargs)
        except Exception:
            # pipeline_mode=pl.Buffered(1) unsupported on this JAX/libtpu:
            # fall back to default double-buffering (identical results).
            _SINGLE_BUFFER_OK = False
            out = _linear_call(x2, w_t, b, single_buffer_resident=False, **kwargs)
    else:
        out = _linear_call(x2, w_t, b, single_buffer_resident=False, **kwargs)
    return out.reshape(*lead, n_classes)


class LinearClassifier:
    """Pallas-TPU equivalent of the PyTorch module (forward = nn.Linear)."""

    def __init__(self, weight, bias):
        self.n_classes, self.in_dim = weight.shape
        # One-time re-layout; the per-call path never pads or transposes.
        self.w_t, self.b = prepare_params(weight, bias)

    def __call__(self, x):
        return linear_classifier(x, self.w_t, self.b, self.n_classes)


if __name__ == "__main__":
    batch, in_dim, n_classes = 8, 32, 16

    key = jax.random.PRNGKey(0)
    kx, kw, kb = jax.random.split(key, 3)

    x = jax.random.normal(kx, (batch, in_dim), dtype=jnp.float32)
    # Deterministic init mimicking nn.Linear's uniform(-1/sqrt(in_dim), ...)
    bound = 1.0 / (in_dim ** 0.5)
    weight = jax.random.uniform(kw, (n_classes, in_dim), dtype=jnp.float32,
                                minval=-bound, maxval=bound)
    bias = jax.random.uniform(kb, (n_classes,), dtype=jnp.float32,
                              minval=-bound, maxval=bound)

    model = LinearClassifier(weight, bias)   # padding/transpose happens once here
    y = model(x)
    jax.block_until_ready(y)

    y_ref = x @ weight.T + bias
    assert y.shape == (batch, n_classes)
    assert jnp.allclose(y, y_ref, atol=1e-5, rtol=1e-5)

    # Ragged batch (not a tile multiple): exercises the cdiv grid with a
    # clipped last block instead of batch padding.
    x2 = jax.random.normal(kx, (13, in_dim), dtype=jnp.float32)
    y2 = linear_classifier(x2, model.w_t, model.b, n_classes, tile_m=8)
    jax.block_until_ready(y2)
    assert y2.shape == (13, n_classes)
    assert jnp.allclose(y2, x2 @ weight.T + bias, atol=1e-5, rtol=1e-5)

    print("KERNEL_OK")
</pallas_src>

<mosaic_0001>
module attributes {stable_mosaic.version = 11 : i64} {
  func.func @_linear_kernel(%arg0: i32, %arg1: i32, %arg2: memref<8x32xf32, #tpu.memory_space<vmem>>, %arg3: memref<32x128xf32, #tpu.memory_space<vmem>>, %arg4: memref<1x128xf32, #tpu.memory_space<vmem>>, %arg5: memref<8x128xf32, #tpu.memory_space<vmem>>) attributes {dimension_semantics = [#tpu.dimension_semantics<parallel>, #tpu.dimension_semantics<parallel>], iteration_bounds = array<i64: 1, 1>, scalar_prefetch = 0 : i64, scratch_operands = 0 : i64, tpu.core_type = #tpu.core_type<tc>, window_params = [{transform_indices = @transform_0, window_bounds = array<i64: 8, 32>}, {pipeline_mode = #tpu.pipeline_mode<synchronous>, transform_indices = @transform_1, window_bounds = array<i64: 32, 128>}, {pipeline_mode = #tpu.pipeline_mode<synchronous>, transform_indices = @transform_2, window_bounds = array<i64: 1, 128>}, {transform_indices = @transform_3, window_bounds = array<i64: 8, 128>}]} {
    %c0 = arith.constant 0 : index
    %c0_0 = arith.constant 0 : index
    %0 = vector.load %arg2[%c0, %c0_0] : memref<8x32xf32, #tpu.memory_space<vmem>>, vector<8x32xf32>
    %c0_1 = arith.constant 0 : index
    %c0_2 = arith.constant 0 : index
    %1 = vector.load %arg3[%c0_1, %c0_2] : memref<32x128xf32, #tpu.memory_space<vmem>>, vector<32x128xf32>
    %cst = arith.constant dense<0.000000e+00> : vector<8x128xf32>
    %2 = tpu.matmul %0, %1, %cst {dimension_numbers = #tpu.dot_dimension_numbers<[1], [0], [0], [1], [0, 0, 1, 1], [], []>} : vector<8x32xf32>, vector<32x128xf32>, vector<8x128xf32> -> vector<8x128xf32>
    %c0_3 = arith.constant 0 : index
    %c0_4 = arith.constant 0 : index
    %3 = vector.load %arg4[%c0_3, %c0_4] : memref<1x128xf32, #tpu.memory_space<vmem>>, vector<1x128xf32>
    %4 = vector.broadcast %3 : vector<1x128xf32> to vector<8x128xf32>
    %5 = arith.addf %2, %4 : vector<8x128xf32>
    %c0_5 = arith.constant 0 : index
    %c0_6 = arith.constant 0 : index
    %6 = vector.load %arg5[%c0_5, %c0_6] : memref<8x128xf32, #tpu.memory_space<vmem>>, vector<8x128xf32>
    tpu.vector_store %arg5[%c0_5, %c0_6], %5 {strides = array<i32>} : memref<8x128xf32, #tpu.memory_space<vmem>>, vector<8x128xf32>,
    return
  }
  func.func @transform_0(%arg0: i32, %arg1: i32) -> (i32, i32) {
    %c0_i32 = arith.constant 0 : i32
    %c0_i32_0 = arith.constant 0 : i32
    return %arg1, %c0_i32 : i32, i32
  }
  func.func @transform_1(%arg0: i32, %arg1: i32) -> (i32, i32) {
    %c0_i32 = arith.constant 0 : i32
    %c0_i32_0 = arith.constant 0 : i32
    return %c0_i32, %arg0 : i32, i32
  }
  func.func @transform_2(%arg0: i32, %arg1: i32) -> (i32, i32) {
    %c0_i32 = arith.constant 0 : i32
    %c0_i32_0 = arith.constant 0 : i32
    return %c0_i32, %arg0 : i32, i32
  }
  func.func @transform_3(%arg0: i32, %arg1: i32) -> (i32, i32) {
    %c0_i32 = arith.constant 0 : i32
    return %arg1, %arg0 : i32, i32
  }
}

module attributes {stable_mosaic.version = 11 : i64} {
  func.func @_linear_kernel(%arg0: i32, %arg1: i32, %arg2: memref<8x32xf32, #tpu.memory_space<vmem>>, %arg3: memref<32x128xf32, #tpu.memory_space<vmem>>, %arg4: memref<1x128xf32, #tpu.memory_space<vmem>>, %arg5: memref<8x128xf32, #tpu.memory_space<vmem>>) attributes {dimension_semantics = [#tpu.dimension_semantics<parallel>, #tpu.dimension_semantics<parallel>], iteration_bounds = array<i64: 1, 1>, scalar_prefetch = 0 : i64, scratch_operands = 0 : i64, tpu.core_type = #tpu.core_type<tc>, window_params = [{transform_indices = @transform_0, window_bounds = array<i64: 8, 32>}, {transform_indices = @transform_1, window_bounds = array<i64: 32, 128>}, {transform_indices = @transform_2, window_bounds = array<i64: 1, 128>}, {transform_indices = @transform_3, window_bounds = array<i64: 8, 128>}]} {
    %c0 = arith.constant 0 : index
    %c0_0 = arith.constant 0 : index
    %0 = vector.load %arg2[%c0, %c0_0] : memref<8x32xf32, #tpu.memory_space<vmem>>, vector<8x32xf32>
    %c0_1 = arith.constant 0 : index
    %c0_2 = arith.constant 0 : index
    %1 = vector.load %arg3[%c0_1, %c0_2] : memref<32x128xf32, #tpu.memory_space<vmem>>, vector<32x128xf32>
    %cst = arith.constant dense<0.000000e+00> : vector<8x128xf32>
    %2 = tpu.matmul %0, %1, %cst {dimension_numbers = #tpu.dot_dimension_numbers<[1], [0], [0], [1], [0, 0, 1, 1], [], []>} : vector<8x32xf32>, vector<32x128xf32>, vector<8x128xf32> -> vector<8x128xf32>
    %c0_3 = arith.constant 0 : index
    %c0_4 = arith.constant 0 : index
    %3 = vector.load %arg4[%c0_3, %c0_4] : memref<1x128xf32, #tpu.memory_space<vmem>>, vector<1x128xf32>
    %4 = vector.broadcast %3 : vector<1x128xf32> to vector<8x128xf32>
    %5 = arith.addf %2, %4 : vector<8x128xf32>
    %c0_5 = arith.constant 0 : index
    %c0_6 = arith.constant 0 : index
    %6 = vector.load %arg5[%c0_5, %c0_6] : memref<8x128xf32, #tpu.memory_space<vmem>>, vector<8x128xf32>
    tpu.vector_store %arg5[%c0_5, %c0_6], %5 {strides = array<i32>} : memref<8x128xf32, #tpu.memory_space<vmem>>, vector<8x128xf32>,
    return
  }
  func.func @transform_0(%arg0: i32, %arg1: i32) -> (i32, i32) {
    %c0_i32 = arith.constant 0 : i32
    %c0_i32_0 = arith.constant 0 : i32
    return %arg1, %c0_i32 : i32, i32
  }
  func.func @transform_1(%arg0: i32, %arg1: i32) -> (i32, i32) {
    %c0_i32 = arith.constant 0 : i32
    %c0_i32_0 = arith.constant 0 : i32
    return %c0_i32, %arg0 : i32, i32
  }
  func.func @transform_2(%arg0: i32, %arg1: i32) -> (i32, i32) {
    %c0_i32 = arith.constant 0 : i32
    %c0_i32_0 = arith.constant 0 : i32
    return %c0_i32, %arg0 : i32, i32
  }
  func.func @transform_3(%arg0: i32, %arg1: i32) -> (i32, i32) {
    %c0_i32 = arith.constant 0 : i32
    return %arg1, %arg0 : i32, i32
  }
}

</mosaic_0001>

<llo_original>
// kernel: _linear_call.1
$region0: #{_linear_call.1}
  #allocation0 [shape = 'u32[]', space=smem, size = 0x4, offset = 0x4, fixed_abs, tag = 'smem constant byte address 0x4 - core index']
  #allocation1 [shape = 'u32[144,128]{1,0:T(1,128)}', space=vmem, size = 0x12000, scoped, tag = 'internal scratch']
  %s0 = inlined_call_operand.hbm [shape: f32[8,32], index: 0, kind: input, shape index: {}]
  %s1 = inlined_call_operand.hbm [shape: f32[32,128], index: 1, kind: input, shape index: {}]
  %s2 = inlined_call_operand.vmem [shape: f32[1,128], index: 2, kind: input, shape index: {}]
  %s3 = inlined_call_operand.hbm [shape: f32[8,128], index: 3, kind: output, shape index: {}]
  %s4 = sld [smem:[#allocation0]]
  $region30: #{_linear_call.1} parent=0
    _
  %s6 = ssub.s32 1, %s4
  %s7 = scalar_select 0, %s6, %s4
  $region1: #{_linear_call.1} parent=0
    #allocation2 [shape = 'u8[4096]{0}', space=vmem, size = 0x1000, scoped, tag = 'input window, operand 0, single buffered']
    #allocation3 [shape = 's32[1]{0}', space=sflag, size = 0x4, scoped, tag = 'scoped memory for _linear_call.1']
    #allocation4 [shape = 's32[1]{0}', space=sflag, size = 0x4, scoped, tag = 'scoped memory for _linear_call.1']
    #allocation5 [shape = 'u8[16384]{0}', space=vmem, size = 0x4000, scoped, tag = 'input window, operand 1, single buffered']
    #allocation6 [shape = 's32[1]{0}', space=sflag, size = 0x4, scoped, tag = 'scoped memory for _linear_call.1']
    #allocation7 [shape = 'u8[4096]{0}', space=vmem, size = 0x1000, scoped, tag = 'output window, operand 0, single buffered']
    %8 = vsyncpa [#allocation3], 0
    %9 = vsyncpa [#allocation6], 0
    %10 = vsyncpa [#allocation4], 0
    // Predicated region
    $region2: #{_linear_call.1} parent=1 // pred_check
      _
    $region3: #{_linear_call.1} parent=1 // pred_check_branch
      %12 = sbr.rel (0) target = $region5
    $region4: #{_linear_call.1} parent=1 // pred_region
      %s14 = ssub.s32 128, 128
      %15 = vsyncadd [#allocation3], %s14
      %s17 = sshll.u32 [#allocation2], 4
      %s18 = int_to_ptr.vmem [resolvable:$true] %s17
      %20 = dma.hbm_to_vmem [thread:$0]  %s0, 128, %s18, [#allocation3]
    $region5: #{_linear_call.1} parent=1 // pred_fallthru
      _
    // Predicated region
    $region6: #{_linear_call.1} parent=1 // pred_check
      _
    $region7: #{_linear_call.1} parent=1 // pred_check_branch
      %22 = sbr.rel (0) target = $region9
    $region8: #{_linear_call.1} parent=1 // pred_region
      %s24 = ssub.s32 512, 512
      %25 = vsyncadd [#allocation6], %s24
      %s26 = sshll.u32 [#allocation5], 4
      %s27 = int_to_ptr.vmem [resolvable:$true] %s26
      %32 = dma.hbm_to_vmem [thread:$0]  %s1, 512, %s27, [#allocation6], 128, 128, 8
    $region9: #{_linear_call.1} parent=1 // pred_fallthru
      _
    // Predicated region
    $region10: #{_linear_call.1} parent=1 // pred_check
      _
    $region11: #{_linear_call.1} parent=1 // pred_check_branch
      %34 = sbr.rel (0) target = $region13
    $region12: #{_linear_call.1} parent=1 // pred_region
      _
    $region13: #{_linear_call.1} parent=1 // pred_fallthru
      _
    // Predicated region
    $region14: #{_linear_call.1} parent=1 // pred_check
      _
    $region15: #{_linear_call.1} parent=1 // pred_check_branch
      %36 = sbr.rel (0) target = $region17
    $region16: #{_linear_call.1} parent=1 // pred_region
      %37 = dma.done [#allocation3], 128
    $region17: #{_linear_call.1} parent=1 // pred_fallthru
      _
    // Predicated region
    $region18: #{_linear_call.1} parent=1 // pred_check
      _
    $region19: #{_linear_call.1} parent=1 // pred_check_branch
      %39 = sbr.rel (0) target = $region21
    $region20: #{_linear_call.1} parent=1 // pred_region
      %40 = dma.done [#allocation6], 512
    $region21: #{_linear_call.1} parent=1 // pred_fallthru
      _
    %v41 = vld [vmem:[#allocation2] sm:$0xff]
    %v42 = vld [vmem:[#allocation5] sm:$0xff]
    %v43 = vld [vmem:[#allocation5 + $0x8] sm:$0xff]
    %v44 = vld [vmem:[#allocation5 + $0x10] sm:$0xff]
    %v45 = vld [vmem:[#allocation5 + $0x18] sm:$0xff]
    %v46 = vld [vmem:[%s2] sm:$0x1]
    %v48 = vlaneseq
    %v49 = vshrl.u32 %v48, 7
    %v50 = vsub.s32 0, %v49
    %v51 = vrot.slane %v46, %v50
    %vm53 = vcmask 261120
    %v55 = vsel %vm53, %v41, 0
    %57 = vmatprep.subr.mxu0 0.0
    %58 = vmatpush1.msra.mxu0 %v42
    %59 = vmatprep.subr.mxu0 0.0
    %60 = vmatpush1.msra.mxu0 %v43
    %61 = vmatprep.subr.mxu0 0.0
    %62 = vmatpush1.msra.mxu0 %v44
    %63 = vmatprep.subr.mxu0 0.0
    %64 = vmatpush1.msra.mxu0 %v45
    %65 = vmatprep.subr.mxu0 0.0
    %66 = vmatpush1.msra.mxu0 0.0
    %67 = vmatprep.subr.mxu0 0.0
    %68 = vmatpush1.msra.mxu0 0.0
    %69 = vmatprep.subr.mxu0 0.0
    %70 = vmatpush1.msra.mxu0 0.0
    %71 = vmatprep.subr.mxu0 0.0
    %72 = vmatpush1.msra.mxu0 0.0
    %73 = vmatprep.subr.mxu0 0.0
    %74 = vmatpush1.msra.mxu0 0.0
    %75 = vmatprep.subr.mxu0 0.0
    %76 = vmatpush1.msra.mxu0 0.0
    %77 = vmatprep.subr.mxu0 0.0
    %78 = vmatpush1.msra.mxu0 0.0
    %79 = vmatprep.subr.mxu0 0.0
    %80 = vmatpush1.msra.mxu0 0.0
    %81 = vmatprep.subr.mxu0 0.0
    %82 = vmatpush1.msra.mxu0 0.0
    %83 = vmatprep.subr.mxu0 0.0
    %84 = vmatpush1.msra.mxu0 0.0
    %85 = vmatprep.subr.mxu0 0.0
    %86 = vmatpush1.msra.mxu0 0.0
    %87 = vmatprep.subr.mxu0 0.0
    %88 = vmatpush1.msra.mxu0 0.0
    %89 = vmatprep.subr.mxu0 0.0
    %90 = vmatpush1.msra.mxu0 0.0
    %91 = vmatprep.subr.mxu0 0.0
    %92 = vmatpush1.msra.mxu0 0.0
    %93 = vmatprep.subr.mxu0 0.0
    %94 = vmatpush1.msra.mxu0 0.0
    %95 = vmatprep.subr.mxu0 0.0
    %96 = vmatpush1.msra.mxu0 0.0
    %97 = vmatprep.subr.mxu0 0.0
    %98 = vmatpush1.msra.mxu0 0.0
    %99 = vmatprep.subr.mxu0 0.0
    %100 = vmatpush1.msra.mxu0 0.0
    %101 = vmatprep.subr.mxu0 0.0
    %102 = vmatpush1.msra.mxu0 0.0
    %103 = vmatprep.subr.mxu0 0.0
    %104 = vmatpush1.msra.mxu0 0.0
    %105 = vmatprep.subr.mxu0 0.0
    %106 = vmatpush1.msra.mxu0 0.0
    %107 = vmatprep.subr.mxu0 0.0
    %108 = vmatpush1.msra.mxu0 0.0
    %109 = vmatprep.subr.mxu0 0.0
    %110 = vmatpush1.msra.mxu0 0.0
    %111 = vmatprep.subr.mxu0 0.0
    %112 = vmatpush1.msra.mxu0 0.0
    %113 = vmatprep.subr.mxu0 0.0
    %114 = vmatpush1.msra.mxu0 0.0
    %115 = vmatprep.subr.mxu0 0.0
    %116 = vmatpush1.msra.mxu0 0.0
    %117 = vmatprep.subr.mxu0 0.0
    %118 = vmatpush1.msra.mxu0 0.0
    %119 = vmatprep.subr.mxu0 0.0
    %120 = vmatpush1.msra.mxu0 0.0
    %121 = vmatprep.mubr.f32.mxu0 0.0
    %122 = vmatmul.mubr.f32.gmra.mrb[0].mxu0 %v55
    %v123 = vpop.f32.mrb[0].mxu0
    %v124 = vadd.f32 %v51, %v123
    %v125 = vpop.f32.mrb[0].mxu0
    %126 = vdwg.mxu0
    %127 = vst [vmem:[#allocation7] sm:$0xff] %v124
    // Predicated region
    $region22: #{_linear_call.1} parent=1 // pred_check
      _
    $region23: #{_linear_call.1} parent=1 // pred_check_branch
      %129 = sbr.rel (0) target = $region25
    $region24: #{_linear_call.1} parent=1 // pred_region
      %s131 = ssub.s32 128, 128
      %132 = vsyncadd [#allocation4], %s131
      %s134 = sshll.u32 [#allocation7], 4
      %s135 = int_to_ptr.vmem [resolvable:$true] %s134
      %137 = dma.vmem_to_hbm [thread:$0]  %s135, 128, %s3, [#allocation4]
    $region25: #{_linear_call.1} parent=1 // pred_fallthru
      _
    // Predicated region
    $region26: #{_linear_call.1} parent=1 // pred_check
      _
    $region27: #{_linear_call.1} parent=1 // pred_check_branch
      %139 = sbr.rel (0) target = $region29
    $region28: #{_linear_call.1} parent=1 // pred_region
      %140 = dma.done [#allocation4], 128
    $region29: #{_linear_call.1} parent=1 // pred_fallthru
      _
    %141 = vsyncpa [#allocation3], 1
    %142 = vsyncpa [#allocation6], 1
    %143 = vsyncpa [#allocation4], 1

// kernel: _linear_call.1
$region0: #{_linear_call.1}
  #allocation0 [shape = 'u32[]', space=smem, size = 0x4, offset = 0x4, fixed_abs, tag = 'smem constant byte address 0x4 - core index']
  #allocation1 [shape = 'u32[144,128]{1,0:T(1,128)}', space=vmem, size = 0x12000, scoped, tag = 'internal scratch']
  %s0 = inlined_call_operand.hbm [shape: f32[8,32], index: 0, kind: input, shape index: {}]
  %s1 = inlined_call_operand.hbm [shape: f32[32,128], index: 1, kind: input, shape index: {}]
  %s2 = inlined_call_operand.vmem [shape: f32[1,128], index: 2, kind: input, shape index: {}]
  %s3 = inlined_call_operand.hbm [shape: f32[8,128], index: 3, kind: output, shape index: {}]
  %s4 = sld [smem:[#allocation0]]
  $region30: #{_linear_call.1} parent=0
    _
  %s6 = ssub.s32 1, %s4
  %s7 = scalar_select 0, %s6, %s4
  $region1: #{_linear_call.1} parent=0
    #allocation2 [shape = 'u8[4096]{0}', space=vmem, size = 0x1000, scoped, tag = 'input window, operand 0, single buffered']
    #allocation3 [shape = 's32[1]{0}', space=sflag, size = 0x4, scoped, tag = 'scoped memory for _linear_call.1']
    #allocation4 [shape = 's32[1]{0}', space=sflag, size = 0x4, scoped, tag = 'scoped memory for _linear_call.1']
    #allocation5 [shape = 'u8[16384]{0}', space=vmem, size = 0x4000, scoped, tag = 'input window, operand 1, single buffered']
    #allocation6 [shape = 's32[1]{0}', space=sflag, size = 0x4, scoped, tag = 'scoped memory for _linear_call.1']
    #allocation7 [shape = 'u8[4096]{0}', space=vmem, size = 0x1000, scoped, tag = 'output window, operand 0, single buffered']
    %8 = vsyncpa [#allocation3], 0
    %9 = vsyncpa [#allocation6], 0
    %10 = vsyncpa [#allocation4], 0
    // Predicated region
    $region2: #{_linear_call.1} parent=1 // pred_check
      _
    $region3: #{_linear_call.1} parent=1 // pred_check_branch
      %12 = sbr.rel (0) target = $region5
    $region4: #{_linear_call.1} parent=1 // pred_region
      %s14 = ssub.s32 128, 128
      %15 = vsyncadd [#allocation3], %s14
      %s17 = sshll.u32 [#allocation2], 4
      %s18 = int_to_ptr.vmem [resolvable:$true] %s17
      %20 = dma.hbm_to_vmem [thread:$0]  %s0, 128, %s18, [#allocation3]
    $region5: #{_linear_call.1} parent=1 // pred_fallthru
      _
    // Predicated region
    $region6: #{_linear_call.1} parent=1 // pred_check
      _
    $region7: #{_linear_call.1} parent=1 // pred_check_branch
      %22 = sbr.rel (0) target = $region9
    $region8: #{_linear_call.1} parent=1 // pred_region
      %s24 = ssub.s32 512, 512
      %25 = vsyncadd [#allocation6], %s24
      %s26 = sshll.u32 [#allocation5], 4
      %s27 = int_to_ptr.vmem [resolvable:$true] %s26
      %32 = dma.hbm_to_vmem [thread:$0]  %s1, 512, %s27, [#allocation6], 128, 128, 8
    $region9: #{_linear_call.1} parent=1 // pred_fallthru
      _
    // Predicated region
    $region10: #{_linear_call.1} parent=1 // pred_check
      _
    $region11: #{_linear_call.1} parent=1 // pred_check_branch
      %34 = sbr.rel (0) target = $region13
    $region12: #{_linear_call.1} parent=1 // pred_region
      _
    $region13: #{_linear_call.1} parent=1 // pred_fallthru
      _
    // Predicated region
    $region14: #{_linear_call.1} parent=1 // pred_check
      _
    $region15: #{_linear_call.1} parent=1 // pred_check_branch
      %36 = sbr.rel (0) target = $region17
    $region16: #{_linear_call.1} parent=1 // pred_region
      %37 = dma.done [#allocation3], 128
    $region17: #{_linear_call.1} parent=1 // pred_fallthru
      _
    // Predicated region
    $region18: #{_linear_call.1} parent=1 // pred_check
      _
    $region19: #{_linear_call.1} parent=1 // pred_check_branch
      %39 = sbr.rel (0) target = $region21
    $region20: #{_linear_call.1} parent=1 // pred_region
      %40 = dma.done [#allocation6], 512
    $region21: #{_linear_call.1} parent=1 // pred_fallthru
      _
    %v41 = vld [vmem:[#allocation2] sm:$0xff]
    %v42 = vld [vmem:[#allocation5] sm:$0xff]
    %v43 = vld [vmem:[#allocation5 + $0x8] sm:$0xff]
    %v44 = vld [vmem:[#allocation5 + $0x10] sm:$0xff]
    %v45 = vld [vmem:[#allocation5 + $0x18] sm:$0xff]
    %v46 = vld [vmem:[%s2] sm:$0x1]
    %v48 = vlaneseq
    %v49 = vshrl.u32 %v48, 7
    %v50 = vsub.s32 0, %v49
    %v51 = vrot.slane %v46, %v50
    %vm53 = vcmask 261120
    %v55 = vsel %vm53, %v41, 0
    %57 = vmatprep.subr.mxu0 0.0
    %58 = vmatpush1.msra.mxu0 %v42
    %59 = vmatprep.subr.mxu0 0.0
    %60 = vmatpush1.msra.mxu0 %v43
    %61 = vmatprep.subr.mxu0 0.0
    %62 = vmatpush1.msra.mxu0 %v44
    %63 = vmatprep.subr.mxu0 0.0
    %64 = vmatpush1.msra.mxu0 %v45
    %65 = vmatprep.subr.mxu0 0.0
    %66 = vmatpush1.msra.mxu0 0.0
    %67 = vmatprep.subr.mxu0 0.0
    %68 = vmatpush1.msra.mxu0 0.0
    %69 = vmatprep.subr.mxu0 0.0
    %70 = vmatpush1.msra.mxu0 0.0
    %71 = vmatprep.subr.mxu0 0.0
    %72 = vmatpush1.msra.mxu0 0.0
    %73 = vmatprep.subr.mxu0 0.0
    %74 = vmatpush1.msra.mxu0 0.0
    %75 = vmatprep.subr.mxu0 0.0
    %76 = vmatpush1.msra.mxu0 0.0
    %77 = vmatprep.subr.mxu0 0.0
    %78 = vmatpush1.msra.mxu0 0.0
    %79 = vmatprep.subr.mxu0 0.0
    %80 = vmatpush1.msra.mxu0 0.0
    %81 = vmatprep.subr.mxu0 0.0
    %82 = vmatpush1.msra.mxu0 0.0
    %83 = vmatprep.subr.mxu0 0.0
    %84 = vmatpush1.msra.mxu0 0.0
    %85 = vmatprep.subr.mxu0 0.0
    %86 = vmatpush1.msra.mxu0 0.0
    %87 = vmatprep.subr.mxu0 0.0
    %88 = vmatpush1.msra.mxu0 0.0
    %89 = vmatprep.subr.mxu0 0.0
    %90 = vmatpush1.msra.mxu0 0.0
    %91 = vmatprep.subr.mxu0 0.0
    %92 = vmatpush1.msra.mxu0 0.0
    %93 = vmatprep.subr.mxu0 0.0
    %94 = vmatpush1.msra.mxu0 0.0
    %95 = vmatprep.subr.mxu0 0.0
    %96 = vmatpush1.msra.mxu0 0.0
    %97 = vmatprep.subr.mxu0 0.0
    %98 = vmatpush1.msra.mxu0 0.0
    %99 = vmatprep.subr.mxu0 0.0
    %100 = vmatpush1.msra.mxu0 0.0
    %101 = vmatprep.subr.mxu0 0.0
    %102 = vmatpush1.msra.mxu0 0.0
    %103 = vmatprep.subr.mxu0 0.0
    %104 = vmatpush1.msra.mxu0 0.0
    %105 = vmatprep.subr.mxu0 0.0
    %106 = vmatpush1.msra.mxu0 0.0
    %107 = vmatprep.subr.mxu0 0.0
    %108 = vmatpush1.msra.mxu0 0.0
    %109 = vmatprep.subr.mxu0 0.0
    %110 = vmatpush1.msra.mxu0 0.0
    %111 = vmatprep.subr.mxu0 0.0
    %112 = vmatpush1.msra.mxu0 0.0
    %113 = vmatprep.subr.mxu0 0.0
    %114 = vmatpush1.msra.mxu0 0.0
    %115 = vmatprep.subr.mxu0 0.0
    %116 = vmatpush1.msra.mxu0 0.0
    %117 = vmatprep.subr.mxu0 0.0
    %118 = vmatpush1.msra.mxu0 0.0
    %119 = vmatprep.subr.mxu0 0.0
    %120 = vmatpush1.msra.mxu0 0.0
    %121 = vmatprep.mubr.f32.mxu0 0.0
    %122 = vmatmul.mubr.f32.gmra.mrb[0].mxu0 %v55
    %v123 = vpop.f32.mrb[0].mxu0
    %v124 = vadd.f32 %v51, %v123
    %v125 = vpop.f32.mrb[0].mxu0
    %126 = vdwg.mxu0
    %127 = vst [vmem:[#allocation7] sm:$0xff] %v124
    // Predicated region
    $region22: #{_linear_call.1} parent=1 // pred_check
      _
    $region23: #{_linear_call.1} parent=1 // pred_check_branch
      %129 = sbr.rel (0) target = $region25
    $region24: #{_linear_call.1} parent=1 // pred_region
      %s131 = ssub.s32 128, 128
      %132 = vsyncadd [#allocation4], %s131
      %s134 = sshll.u32 [#allocation7], 4
      %s135 = int_to_ptr.vmem [resolvable:$true] %s134
      %137 = dma.vmem_to_hbm [thread:$0]  %s135, 128, %s3, [#allocation4]
    $region25: #{_linear_call.1} parent=1 // pred_fallthru
      _
    // Predicated region
    $region26: #{_linear_call.1} parent=1 // pred_check
      _
    $region27: #{_linear_call.1} parent=1 // pred_check_branch
      %139 = sbr.rel (0) target = $region29
    $region28: #{_linear_call.1} parent=1 // pred_region
      %140 = dma.done [#allocation4], 128
    $region29: #{_linear_call.1} parent=1 // pred_fallthru
      _
    %141 = vsyncpa [#allocation3], 1
    %142 = vsyncpa [#allocation6], 1
    %143 = vsyncpa [#allocation4], 1

</llo_original>
